<compile_context>
chip_gen: v6e
topology: v6e:2x2x1
jax: 0.10.0
libtpu: 0.0.40
codegen_flags: <defaults>
</compile_context>

<pallas_src>
import functools

import jax
import jax.numpy as jnp
from jax import lax
from jax.experimental import pallas as pl
from jax.experimental.pallas import tpu as pltpu

_MIB = 1024 * 1024
PAD_LOGIT = -1.0e4        # fallback padding: exp underflows -> exactly zero loss
_SUM_BUF_CAP = 8 * _MIB   # max bytes per streamed input buffer (sum/mean path)
_NONE_BUF_CAP = 4 * _MIB  # max bytes per streamed buffer ('none' path)


def _vmem_capacity_bytes():
    """Per-core VMEM capacity; conservative default if the query fails."""
    try:
        cap = getattr(pltpu.get_tpu_info(), "vmem_capacity_bytes", None)
        if cap:
            return int(cap)
    except Exception:
        pass
    return 64 * _MIB  # v7x per-TensorCore (smallest current generation)


def _plan_layout(total):
    """Pick a lane-dense (cols, pad) view; padding only as a rare fallback."""
    for cols in (1024, 512, 256, 128):
        if total % cols == 0:
            return cols, 0
    # TODO(synk): sizes that are not a multiple of 128 still take one host-side
    # pad copy; every other size is copy-free.
    padded = -(-total // 128) * 128
    return 128, padded - total


def _plan_tiles(rows, cols, itemsizes, per_buffer_cap):
    """Generation-aware row tile / in-kernel group sizes + explicit VMEM limit."""
    cap = _vmem_capacity_bytes()
    n_streamed = len(itemsizes)
    # Keep the double-buffered block footprint around <= cap/4.
    per_buf = max(_MIB, min(per_buffer_cap, cap // (8 * n_streamed)))
    group = max(8, 4096 // cols)          # >= 8 sublanes, a few f32 vregs/group
    if rows <= group:
        row_tile, group, num_groups = rows, rows, 1
    else:
        target_rows = max(group, per_buf // (4 * cols))
        row_tile = max(group, (min(target_rows, rows) // group) * group)
        num_groups = row_tile // group
    num_tiles = -(-rows // row_tile)
    last_rows = rows - (num_tiles - 1) * row_tile
    footprint = 2 * row_tile * cols * sum(itemsizes)    # double-buffered blocks
    vmem_limit = max(32 * _MIB, min(footprint + 16 * _MIB, (cap * 3) // 4))
    return row_tile, group, num_groups, num_tiles, last_rows, int(vmem_limit)


def _focal_elementwise(x, y, gamma, alpha):
    """Numerically-stable focal BCE-with-logits, all in f32."""
    z = jnp.exp(-jnp.abs(x))                 # reused by BCE term and sigmoid
    # BCEWithLogits (reduction='none'): max(x,0) - x*y + log(1 + exp(-|x|))
    bce = jnp.maximum(x, 0.0) - x * y + jnp.log1p(z)
    # TODO(synk): on v7x pl.reciprocal(..., approx=True) would trim EUP work,
    # but costs ~2^-12 accuracy; keep exact so results match the reference.
    inv = pl.reciprocal(1.0 + z, approx=False)
    pred_prob = jnp.where(x >= 0.0, inv, z * inv)        # sigmoid(x)
    one_m_y = 1.0 - y
    p_t = y * pred_prob + one_m_y * (1.0 - pred_prob)
    alpha_factor = y * alpha + one_m_y * (1.0 - alpha)
    t = jnp.maximum(1.0 - p_t, 0.0)          # clamp: guards sqrt/pow of -eps
    if gamma == 2.0:
        mod = t * t
    elif gamma == 1.5:
        mod = t * jnp.sqrt(t)
    elif gamma == 1.0:
        mod = t
    elif gamma == 0.0:
        mod = jnp.ones_like(t)
    else:
        mod = t ** gamma
    return bce * alpha_factor * mod


def _focal_sum_kernel(pred_ref, true_ref, psum_ref, *, gamma, alpha,
                      group, num_groups, row_tile, last_rows):
    """Per-tile partial sum; refs are sliced in GROUP-row chunks (no big temps)."""
    cols = pred_ref.shape[-1]
    needs_mask = last_rows != row_tile        # static: last grid tile is ragged
    if needs_mask:
        limit = jnp.where(pl.program_id(0) == pl.num_programs(0) - 1,
                          last_rows, row_tile)
        row_ids = lax.broadcasted_iota(jnp.int32, (group, 1), 0)

    def group_loss(start):
        x = pred_ref[pl.ds(start, group), :].astype(jnp.float32)
        y = true_ref[pl.ds(start, group), :].astype(jnp.float32)
        loss = _focal_elementwise(x, y, gamma, alpha)
        if needs_mask:
            loss = jnp.where((start + row_ids) < limit, loss, 0.0)
        return loss

    if num_groups == 1:
        acc = group_loss(0)
    else:
        def body(g, acc):
            return acc + group_loss(pl.multiple_of(g * group, group))
        acc = lax.fori_loop(0, num_groups, body,
                            jnp.zeros((group, cols), jnp.float32),
                            unroll=min(4, num_groups))
    psum_ref[...] = jnp.sum(acc, axis=0, keepdims=True)[None]


def _focal_none_kernel(pred_ref, true_ref, loss_ref, *, gamma, alpha,
                       group, num_groups):
    """Elementwise focal loss; each GROUP-row slice is written straight out."""
    def write_group(start):
        x = pred_ref[pl.ds(start, group), :].astype(jnp.float32)
        y = true_ref[pl.ds(start, group), :].astype(jnp.float32)
        loss = _focal_elementwise(x, y, gamma, alpha)
        loss_ref[pl.ds(start, group), :] = loss.astype(loss_ref.dtype)

    if num_groups == 1:
        write_group(0)
    else:
        def body(g, carry):
            write_group(pl.multiple_of(g * group, group))
            return carry
        lax.fori_loop(0, num_groups, body, 0, unroll=min(4, num_groups))


def focal_loss(pred, true, gamma=1.5, alpha=0.25, reduction="mean"):
    """Pallas FocalLoss(BCEWithLogitsLoss(reduction=reduction)) forward."""
    assert pred.shape == true.shape
    orig_shape, out_dtype, total = pred.shape, pred.dtype, pred.size
    gamma, alpha = float(gamma), float(alpha)

    cols, pad = _plan_layout(total)
    pred_flat = pred.reshape(-1)
    true_flat = true.reshape(-1)
    if pad:
        # Rare fallback only; padded logits contribute exactly zero loss.
        pred_flat = jnp.pad(pred_flat, (0, pad), constant_values=PAD_LOGIT)
        true_flat = jnp.pad(true_flat, (0, pad), constant_values=0)
    rows = (total + pad) // cols
    pred2 = pred_flat.reshape(rows, cols)
    true2 = true_flat.reshape(rows, cols)
    in_itemsizes = (pred2.dtype.itemsize, true2.dtype.itemsize)

    if reduction in ("mean", "sum"):
        (row_tile, group, num_groups, num_tiles, last_rows,
         vmem_limit) = _plan_tiles(rows, cols, in_itemsizes, _SUM_BUF_CAP)
        kernel = functools.partial(
            _focal_sum_kernel, gamma=gamma, alpha=alpha, group=group,
            num_groups=num_groups, row_tile=row_tile, last_rows=last_rows)
        partials = pl.pallas_call(
            kernel,
            out_shape=jax.ShapeDtypeStruct((num_tiles, 1, cols), jnp.float32),
            grid_spec=pltpu.PrefetchScalarGridSpec(
                num_scalar_prefetch=0,
                grid=(num_tiles,),
                in_specs=[pl.BlockSpec((row_tile, cols), lambda i: (i, 0)),
                          pl.BlockSpec((row_tile, cols), lambda i: (i, 0))],
                out_specs=pl.BlockSpec((1, 1, cols), lambda i: (i, 0, 0)),
            ),
            compiler_params=pltpu.CompilerParams(
                dimension_semantics=("parallel",),
                vmem_limit_bytes=vmem_limit),
            cost_estimate=pl.CostEstimate(
                flops=18 * total, transcendentals=4 * total,
                bytes_accessed=total * sum(in_itemsizes) + num_tiles * cols * 4),
        )(pred2, true2)
        total_sum = jnp.sum(partials)
        return total_sum / total if reduction == "mean" else total_sum

    # reduction == 'none'
    itemsizes = in_itemsizes + (jnp.dtype(out_dtype).itemsize,)
    (row_tile, group, num_groups, num_tiles, _last_rows,
     vmem_limit) = _plan_tiles(rows, cols, itemsizes, _NONE_BUF_CAP)
    kernel = functools.partial(
        _focal_none_kernel, gamma=gamma, alpha=alpha, group=group,
        num_groups=num_groups)
    loss2 = pl.pallas_call(
        kernel,
        out_shape=jax.ShapeDtypeStruct((rows, cols), out_dtype),
        grid_spec=pltpu.PrefetchScalarGridSpec(
            num_scalar_prefetch=0,
            grid=(num_tiles,),
            in_specs=[pl.BlockSpec((row_tile, cols), lambda i: (i, 0)),
                      pl.BlockSpec((row_tile, cols), lambda i: (i, 0))],
            out_specs=pl.BlockSpec((row_tile, cols), lambda i: (i, 0)),
        ),
        compiler_params=pltpu.CompilerParams(
            dimension_semantics=("parallel",),
            vmem_limit_bytes=vmem_limit),
        cost_estimate=pl.CostEstimate(
            flops=18 * total, transcendentals=4 * total,
            bytes_accessed=total * sum(itemsizes)),
    )(pred2, true2)
    if pad:
        return loss2.reshape(-1)[:total].reshape(orig_shape)
    return loss2.reshape(orig_shape)


def _focal_loss_ref(pred, true, gamma=1.5, alpha=0.25, reduction="mean"):
    """Pure-JAX reference mirroring the PyTorch module."""
    x = pred.astype(jnp.float32)
    y = true.astype(jnp.float32)
    bce = jnp.maximum(x, 0.0) - x * y + jnp.log1p(jnp.exp(-jnp.abs(x)))
    p = jax.nn.sigmoid(x)
    p_t = y * p + (1.0 - y) * (1.0 - p)
    alpha_factor = y * alpha + (1.0 - y) * (1.0 - alpha)
    loss = bce * alpha_factor * (1.0 - p_t) ** gamma
    if reduction == "mean":
        return loss.mean()
    if reduction == "sum":
        return loss.sum()
    return loss


def _check(pred, true):
    out_mean = jax.block_until_ready(
        focal_loss(pred, true, 1.5, 0.25, "mean"))
    ref_mean = _focal_loss_ref(pred, true, 1.5, 0.25, "mean")
    assert jnp.allclose(out_mean, ref_mean, rtol=1e-5, atol=1e-6), (out_mean, ref_mean)

    out_sum = jax.block_until_ready(
        focal_loss(pred, true, 1.5, 0.25, "sum"))
    ref_sum = _focal_loss_ref(pred, true, 1.5, 0.25, "sum")
    assert jnp.allclose(out_sum, ref_sum, rtol=1e-5, atol=1e-4), (out_sum, ref_sum)

    out_none = jax.block_until_ready(
        focal_loss(pred, true, 1.5, 0.25, "none"))
    ref_none = _focal_loss_ref(pred, true, 1.5, 0.25, "none")
    assert out_none.shape == pred.shape and out_none.dtype == pred.dtype
    assert jnp.allclose(out_none, ref_none, rtol=1e-5, atol=1e-6)


if __name__ == "__main__":
    key = jax.random.PRNGKey(0)
    k1, k2, k3, k4 = jax.random.split(key, 4)

    # NCHW-shaped logits / binary targets, as the wrapped BCEWithLogitsLoss
    # would receive from a detection head (copy-free, single-tile path).
    pred = jax.random.normal(k1, (2, 4, 16, 16), dtype=jnp.float32) * 2.0
    true = (jax.random.uniform(k2, (2, 4, 16, 16)) > 0.5).astype(jnp.float32)
    _check(pred, true)

    # A larger shape whose row count does not divide the row tile, exercising
    # the partial-block path (clipped writes + in-kernel tail masking).
    pred_r = jax.random.normal(k3, (3, 5, 40, 128), dtype=jnp.float32) * 2.0
    true_r = (jax.random.uniform(k4, (3, 5, 40, 128)) > 0.5).astype(jnp.float32)
    _check(pred_r, true_r)

    print("KERNEL_OK")
</pallas_src>

<mosaic_0001>
module attributes {stable_mosaic.version = 11 : i64} {
  func.func @_focal_sum_kernel(%arg0: i32, %arg1: memref<2x1024xf32, #tpu.memory_space<vmem>>, %arg2: memref<2x1024xf32, #tpu.memory_space<vmem>>, %arg3: memref<1x1x1024xf32, #tpu.memory_space<vmem>>) attributes {dimension_semantics = [#tpu.dimension_semantics<parallel>], iteration_bounds = array<i64: 1>, scalar_prefetch = 0 : i64, scratch_operands = 0 : i64, tpu.core_type = #tpu.core_type<tc>, window_params = [{transform_indices = @transform_0, window_bounds = array<i64: 2, 1024>}, {transform_indices = @transform_1, window_bounds = array<i64: 2, 1024>}, {transform_indices = @transform_2, window_bounds = array<i64: 1, 1, 1024>}]} {
    %c0 = arith.constant 0 : index
    %c0_0 = arith.constant 0 : index
    %0 = vector.load %arg1[%c0, %c0_0] : memref<2x1024xf32, #tpu.memory_space<vmem>>, vector<2x1024xf32>
    %c0_1 = arith.constant 0 : index
    %c0_2 = arith.constant 0 : index
    %1 = vector.load %arg2[%c0_1, %c0_2] : memref<2x1024xf32, #tpu.memory_space<vmem>>, vector<2x1024xf32>
    %2 = math.absf %0 : vector<2x1024xf32>
    %cst = arith.constant 0.000000e+00 : f32
    %3 = vector.broadcast %cst : f32 to vector<2x1024xf32>
    %4 = arith.subf %3, %2 : vector<2x1024xf32>
    %5 = math.exp %4 : vector<2x1024xf32>
    %cst_3 = arith.constant 0.000000e+00 : f32
    %6 = vector.broadcast %cst_3 : f32 to vector<2x1024xf32>
    %7 = arith.maximumf %0, %6 : vector<2x1024xf32>
    %8 = arith.mulf %0, %1 : vector<2x1024xf32>
    %9 = arith.subf %7, %8 : vector<2x1024xf32>
    %10 = math.log1p %5 : vector<2x1024xf32>
    %11 = arith.addf %9, %10 : vector<2x1024xf32>
    %cst_4 = arith.constant 1.000000e+00 : f32
    %12 = vector.broadcast %cst_4 : f32 to vector<2x1024xf32>
    %13 = arith.addf %12, %5 : vector<2x1024xf32>
    %14 = tpu.reciprocal %13 : vector<2x1024xf32> -> vector<2x1024xf32>
    %cst_5 = arith.constant 0.000000e+00 : f32
    %15 = vector.broadcast %cst_5 : f32 to vector<2x1024xf32>
    %16 = arith.cmpf oge, %0, %15 : vector<2x1024xf32>
    %17 = arith.mulf %5, %14 : vector<2x1024xf32>
    %18 = arith.select %16, %14, %17 : vector<2x1024xi1>, vector<2x1024xf32>
    %cst_6 = arith.constant 1.000000e+00 : f32
    %19 = vector.broadcast %cst_6 : f32 to vector<2x1024xf32>
    %20 = arith.subf %19, %1 : vector<2x1024xf32>
    %21 = arith.mulf %1, %18 : vector<2x1024xf32>
    %cst_7 = arith.constant 1.000000e+00 : f32
    %22 = vector.broadcast %cst_7 : f32 to vector<2x1024xf32>
    %23 = arith.subf %22, %18 : vector<2x1024xf32>
    %24 = arith.mulf %20, %23 : vector<2x1024xf32>
    %25 = arith.addf %21, %24 : vector<2x1024xf32>
    %cst_8 = arith.constant 2.500000e-01 : f32
    %26 = vector.broadcast %cst_8 : f32 to vector<2x1024xf32>
    %27 = arith.mulf %1, %26 : vector<2x1024xf32>
    %cst_9 = arith.constant 7.500000e-01 : f32
    %28 = vector.broadcast %cst_9 : f32 to vector<2x1024xf32>
    %29 = arith.mulf %20, %28 : vector<2x1024xf32>
    %30 = arith.addf %27, %29 : vector<2x1024xf32>
    %cst_10 = arith.constant 1.000000e+00 : f32
    %31 = vector.broadcast %cst_10 : f32 to vector<2x1024xf32>
    %32 = arith.subf %31, %25 : vector<2x1024xf32>
    %cst_11 = arith.constant 0.000000e+00 : f32
    %33 = vector.broadcast %cst_11 : f32 to vector<2x1024xf32>
    %34 = arith.maximumf %32, %33 : vector<2x1024xf32>
    %35 = math.sqrt %34 : vector<2x1024xf32>
    %36 = arith.mulf %34, %35 : vector<2x1024xf32>
    %37 = arith.mulf %11, %30 : vector<2x1024xf32>
    %38 = arith.mulf %37, %36 : vector<2x1024xf32>
    %cst_12 = arith.constant dense<0.000000e+00> : vector<1024xf32>
    %39 = vector.multi_reduction <add>, %38, %cst_12 [0] : vector<2x1024xf32> to vector<1024xf32>
    %40 = vector.shape_cast %39 : vector<1024xf32> to vector<1x1024xf32>
    %41 = vector.shape_cast %40 : vector<1x1024xf32> to vector<1x1x1024xf32>
    %c0_13 = arith.constant 0 : index
    %c0_14 = arith.constant 0 : index
    %c0_15 = arith.constant 0 : index
    %42 = vector.load %arg3[%c0_13, %c0_14, %c0_15] : memref<1x1x1024xf32, #tpu.memory_space<vmem>>, vector<1x1x1024xf32>
    tpu.vector_store %arg3[%c0_13, %c0_14, %c0_15], %41 {strides = array<i32>} : memref<1x1x1024xf32, #tpu.memory_space<vmem>>, vector<1x1x1024xf32>,
    return
  }
  func.func @transform_0(%arg0: i32) -> (i32, i32) {
    %c0_i32 = arith.constant 0 : i32
    %c0_i32_0 = arith.constant 0 : i32
    return %arg0, %c0_i32 : i32, i32
  }
  func.func @transform_1(%arg0: i32) -> (i32, i32) {
    %c0_i32 = arith.constant 0 : i32
    %c0_i32_0 = arith.constant 0 : i32
    return %arg0, %c0_i32 : i32, i32
  }
  func.func @transform_2(%arg0: i32) -> (i32, i32, i32) {
    %c0_i32 = arith.constant 0 : i32
    %c0_i32_0 = arith.constant 0 : i32
    %c0_i32_1 = arith.constant 0 : i32
    return %arg0, %c0_i32, %c0_i32_0 : i32, i32, i32
  }
}

</mosaic_0001>

<llo_original>
// kernel: tpu_custom_call.1
$region0: #{tpu_custom_call.1}
  #allocation0 [shape = 'u32[]', space=smem, size = 0x4, offset = 0x4, fixed_abs, tag = 'smem constant byte address 0x4 - core index']
  #allocation1 [shape = 'u32[144,128]{1,0:T(1,128)}', space=vmem, size = 0x12000, scoped, tag = 'internal scratch']
  %s0 = inlined_call_operand.hbm [shape: f32[2,1024], index: 0, kind: input, shape index: {}]
  %s1 = inlined_call_operand.hbm [shape: f32[2,1024], index: 1, kind: input, shape index: {}]
  %s2 = inlined_call_operand.hbm [shape: f32[1,1,1024], index: 2, kind: output, shape index: {}]
  %s3 = sld [smem:[#allocation0]]
  $region26: #{tpu_custom_call.1} parent=0
    _
  %s5 = ssub.s32 1, %s3
  %s6 = scalar_select 0, %s5, %s3
  $region1: #{tpu_custom_call.1} parent=0
    #allocation2 [shape = 'u8[8192]{0}', space=vmem, size = 0x2000, scoped, tag = 'input window, operand 0, single buffered']
    #allocation3 [shape = 's32[1]{0}', space=sflag, size = 0x4, scoped, tag = 'scoped memory for tpu_custom_call.1']
    #allocation4 [shape = 's32[1]{0}', space=sflag, size = 0x4, scoped, tag = 'scoped memory for tpu_custom_call.1']
    #allocation5 [shape = 'u8[8192]{0}', space=vmem, size = 0x2000, scoped, tag = 'input window, operand 1, single buffered']
    #allocation6 [shape = 's32[1]{0}', space=sflag, size = 0x4, scoped, tag = 'scoped memory for tpu_custom_call.1']
    #allocation7 [shape = 'u8[4096]{0}', space=vmem, size = 0x1000, scoped, tag = 'output window, operand 0, single buffered']
    %7 = vsyncpa [#allocation3], 0
    %8 = vsyncpa [#allocation6], 0
    %9 = vsyncpa [#allocation4], 0
    // Predicated region
    $region2: #{tpu_custom_call.1} parent=1 // pred_check
      _
    $region3: #{tpu_custom_call.1} parent=1 // pred_check_branch
      %11 = sbr.rel (0) target = $region5
    $region4: #{tpu_custom_call.1} parent=1 // pred_region
      %s13 = ssub.s32 256, 256
      %14 = vsyncadd [#allocation3], %s13
      %s16 = sshll.u32 [#allocation2], 4
      %s17 = int_to_ptr.vmem [resolvable:$true] %s16
      %19 = dma.hbm_to_vmem [thread:$0]  %s0, 256, %s17, [#allocation3]
    $region5: #{tpu_custom_call.1} parent=1 // pred_fallthru
      _
    // Predicated region
    $region6: #{tpu_custom_call.1} parent=1 // pred_check
      _
    $region7: #{tpu_custom_call.1} parent=1 // pred_check_branch
      %21 = sbr.rel (0) target = $region9
    $region8: #{tpu_custom_call.1} parent=1 // pred_region
      %s23 = ssub.s32 256, 256
      %24 = vsyncadd [#allocation6], %s23
      %s26 = sshll.u32 [#allocation5], 4
      %s27 = int_to_ptr.vmem [resolvable:$true] %s26
      %29 = dma.hbm_to_vmem [thread:$0]  %s1, 256, %s27, [#allocation6]
    $region9: #{tpu_custom_call.1} parent=1 // pred_fallthru
      _
    // Predicated region
    $region10: #{tpu_custom_call.1} parent=1 // pred_check
      _
    $region11: #{tpu_custom_call.1} parent=1 // pred_check_branch
      %31 = sbr.rel (0) target = $region13
    $region12: #{tpu_custom_call.1} parent=1 // pred_region
      %32 = dma.done [#allocation3], 256
    $region13: #{tpu_custom_call.1} parent=1 // pred_fallthru
      _
    // Predicated region
    $region14: #{tpu_custom_call.1} parent=1 // pred_check
      _
    $region15: #{tpu_custom_call.1} parent=1 // pred_check_branch
      %34 = sbr.rel (0) target = $region17
    $region16: #{tpu_custom_call.1} parent=1 // pred_region
      %35 = dma.done [#allocation6], 256
    $region17: #{tpu_custom_call.1} parent=1 // pred_fallthru
      _
    %v36 = vld [vmem:[#allocation2] sm:$0xff]
    %v37 = vld [vmem:[#allocation2 + $0x8] sm:$0xff]
    %v38 = vld [vmem:[#allocation5] sm:$0xff]
    %v39 = vld [vmem:[#allocation5 + $0x8] sm:$0xff]
    %v40 = vand.u32 2147483647, %v36
    %v41 = vand.u32 2147483647, %v37
    %v42 = vsub.f32 0.0, %v40
    %v43 = vsub.f32 0.0, %v41
    %v44 = vmul.f32 %v42, 1.442695
    %v45 = vpow.pop %v44
    %v46 = vmul.f32 %v43, 1.442695
    %v47 = vpow.pop %v46
    %v48 = vmax.f32 %v36, 0.0
    %v49 = vmax.f32 %v37, 0.0
    %v50 = vmul.f32 %v36, %v38
    %v51 = vmul.f32 %v37, %v39
    %v52 = vsub.f32 %v48, %v50
    %v53 = vsub.f32 %v49, %v51
    %v54 = vadd.f32 %v45, 1.0
    %v55 = vlog2.pop %v54
    %v56 = vmul.f32 %v55, 0.6931472
    %v57 = vmul.f32 -0.5, %v45
    %v58 = vadd.f32 %v57, 1.0
    %v59 = vmul.f32 %v58, %v45
    %v60 = vand.u32 2147483647, %v45
    %vm61 = vcmp.lt.f32.partialorder %v60, 0.0004427343
    %v62 = vsel %vm61, %v59, %v56
    %v63 = vadd.f32 %v47, 1.0
    %v64 = vlog2.pop %v63
    %v65 = vmul.f32 %v64, 0.6931472
    %v66 = vmul.f32 -0.5, %v47
    %v67 = vadd.f32 %v66, 1.0
    %v68 = vmul.f32 %v67, %v47
    %v69 = vand.u32 2147483647, %v47
    %vm70 = vcmp.lt.f32.partialorder %v69, 0.0004427343
    %v71 = vsel %vm70, %v68, %v65
    %v72 = vadd.f32 %v52, %v62
    %v73 = vadd.f32 %v53, %v71
    %v74 = vadd.f32 %v45, 1.0
    %v75 = vadd.f32 %v47, 1.0
    %v76 = vrcp.pop %v74
    %v77 = vrcp.pop %v75
    %vm78 = vcmp.ge.f32.partialorder %v36, 0.0
    %vm79 = vcmp.ge.f32.partialorder %v37, 0.0
    %v80 = vmul.f32 %v45, %v76
    %v81 = vmul.f32 %v47, %v77
    %v82 = vsel %vm78, %v76, %v80
    %v83 = vsel %vm79, %v77, %v81
    %v84 = vsub.f32 1.0, %v38
    %v85 = vsub.f32 1.0, %v39
    %v86 = vmul.f32 %v38, %v82
    %v87 = vmul.f32 %v39, %v83
    %v88 = vsub.f32 1.0, %v82
    %v89 = vsub.f32 1.0, %v83
    %v90 = vmul.f32 %v84, %v88
    %v91 = vmul.f32 %v85, %v89
    %v92 = vadd.f32 %v86, %v90
    %v93 = vadd.f32 %v87, %v91
    %v94 = vmul.f32 %v38, 0.25
    %v95 = vmul.f32 %v39, 0.25
    %v96 = vmul.f32 %v84, 0.75
    %v97 = vmul.f32 %v85, 0.75
    %v98 = vadd.f32 %v94, %v96
    %v99 = vadd.f32 %v95, %v97
    %v100 = vsub.f32 1.0, %v92
    %v101 = vsub.f32 1.0, %v93
    %v102 = vmax.f32 %v100, 0.0
    %v103 = vmax.f32 %v101, 0.0
    %v104 = vrsqrt.pop %v102
    %v105 = vmul.f32 %v102, %v104
    %vm106 = vcmp.eq.f32.partialorder %v102, inf
    %v107 = vsel %vm106, %v102, %v105
    %vm108 = vcmp.eq.f32.partialorder %v102, 0.0
    %v109 = vand.u32 %v102, 2147483648
    %v110 = vsel %vm108, %v109, %v107
    %v111 = vrsqrt.pop %v103
    %v112 = vmul.f32 %v103, %v111
    %vm113 = vcmp.eq.f32.partialorder %v103, inf
    %v114 = vsel %vm113, %v103, %v112
    %vm115 = vcmp.eq.f32.partialorder %v103, 0.0
    %v116 = vand.u32 %v103, 2147483648
    %v117 = vsel %vm115, %v116, %v114
    %v118 = vmul.f32 %v102, %v110
    %v119 = vmul.f32 %v103, %v117
    %v120 = vmul.f32 %v72, %v98
    %v121 = vmul.f32 %v73, %v99
    %v122 = vmul.f32 %v120, %v118
    %v123 = vmul.f32 %v121, %v119
    %v126 = vcombine.high %v122, %v122
    %v128 = vunpack.c.l.s4 1983009808
    %v129 = vunpack.c.0.s8 %v128
    %v130 = vlaneseq
    %v131 = vshrl.u32 %v130, 7
    %v132 = vsub.s32 %v129, %v131
    %v133 = vrot.slane %v122, %v132
    %v135 = vunpack.c.l.s4 1983009808
    %v136 = vunpack.c.0.s8 %v135
    %v137 = vlaneseq
    %v138 = vshrl.u32 %v137, 7
    %v139 = vsub.s32 %v136, %v138
    %v140 = vrot.slane %v126, %v139
    %v141 = vcombine.high %v133, %v133
    %v142 = vcombine.high %v140, %v140
    %v143 = vcombine.high %v123, %v123
    %v145 = vunpack.c.l.s4 1983009808
    %v146 = vunpack.c.0.s8 %v145
    %v147 = vlaneseq
    %v148 = vshrl.u32 %v147, 7
    %v149 = vsub.s32 %v146, %v148
    %v150 = vrot.slane %v123, %v149
    %v152 = vunpack.c.l.s4 1983009808
    %v153 = vunpack.c.0.s8 %v152
    %v154 = vlaneseq
    %v155 = vshrl.u32 %v154, 7
    %v156 = vsub.s32 %v153, %v155
    %v157 = vrot.slane %v143, %v156
    %v158 = vcombine.high %v150, %v150
    %v159 = vcombine.high %v157, %v157
    %vm168 = vcmask 1041408
    %v169 = vsel %vm168, %v133, 0.0
    %v170 = vrot.slane %v169, 4
    %v171 = vadd.f32 %v169, %v170
    %v172 = vrot.slane %v171, 2
    %v173 = vadd.f32 %v171, %v172
    %v174 = vrot.slane %v173, 1
    %v175 = vadd.f32 %v173, %v174
    %v176 = vsel %vm168, %v141, 0.0
    %v177 = vrot.slane %v176, 4
    %v178 = vadd.f32 %v176, %v177
    %v179 = vrot.slane %v178, 2
    %v180 = vadd.f32 %v178, %v179
    %v181 = vrot.slane %v180, 1
    %v182 = vadd.f32 %v180, %v181
    %v183 = vsel %vm168, %v140, 0.0
    %v184 = vrot.slane %v183, 4
    %v185 = vadd.f32 %v183, %v184
    %v186 = vrot.slane %v185, 2
    %v187 = vadd.f32 %v185, %v186
    %v188 = vrot.slane %v187, 1
    %v189 = vadd.f32 %v187, %v188
    %v190 = vsel %vm168, %v142, 0.0
    %v191 = vrot.slane %v190, 4
    %v192 = vadd.f32 %v190, %v191
    %v193 = vrot.slane %v192, 2
    %v194 = vadd.f32 %v192, %v193
    %v195 = vrot.slane %v194, 1
    %v196 = vadd.f32 %v194, %v195
    %v197 = vsel %vm168, %v150, 0.0
    %v198 = vrot.slane %v197, 4
    %v199 = vadd.f32 %v197, %v198
    %v200 = vrot.slane %v199, 2
    %v201 = vadd.f32 %v199, %v200
    %v202 = vrot.slane %v201, 1
    %v203 = vadd.f32 %v201, %v202
    %v204 = vsel %vm168, %v158, 0.0
    %v205 = vrot.slane %v204, 4
    %v206 = vadd.f32 %v204, %v205
    %v207 = vrot.slane %v206, 2
    %v208 = vadd.f32 %v206, %v207
    %v209 = vrot.slane %v208, 1
    %v210 = vadd.f32 %v208, %v209
    %v211 = vsel %vm168, %v157, 0.0
    %v212 = vrot.slane %v211, 4
    %v213 = vadd.f32 %v211, %v212
    %v214 = vrot.slane %v213, 2
    %v215 = vadd.f32 %v213, %v214
    %v216 = vrot.slane %v215, 1
    %v217 = vadd.f32 %v215, %v216
    %v218 = vsel %vm168, %v159, 0.0
    %v219 = vrot.slane %v218, 4
    %v220 = vadd.f32 %v218, %v219
    %v221 = vrot.slane %v220, 2
    %v222 = vadd.f32 %v220, %v221
    %v223 = vrot.slane %v222, 1
    %v224 = vadd.f32 %v222, %v223
    %v233 = vcombine.low %v175, %v182
    %v234 = vcombine.low %v189, %v196
    %v235 = vcombine.low %v203, %v210
    %v236 = vcombine.low %v217, %v224
    %v238 = vunpack.c.l.s4 1966171168
    %v239 = vunpack.c.0.s8 %v238
    %v240 = vlaneseq
    %v241 = vshrl.u32 %v240, 7
    %v242 = vsub.s32 %v239, %v241
    %v243 = vrot.slane %v233, %v242
    %v245 = vunpack.c.l.s4 1966171168
    %v246 = vunpack.c.0.s8 %v245
    %v247 = vlaneseq
    %v248 = vshrl.u32 %v247, 7
    %v249 = vsub.s32 %v246, %v248
    %v250 = vrot.slane %v234, %v249
    %v252 = vunpack.c.l.s4 1966171168
    %v253 = vunpack.c.0.s8 %v252
    %v254 = vlaneseq
    %v255 = vshrl.u32 %v254, 7
    %v256 = vsub.s32 %v253, %v255
    %v257 = vrot.slane %v235, %v256
    %v259 = vunpack.c.l.s4 1966171168
    %v260 = vunpack.c.0.s8 %v259
    %v261 = vlaneseq
    %v262 = vshrl.u32 %v261, 7
    %v263 = vsub.s32 %v260, %v262
    %v264 = vrot.slane %v236, %v263
    %v265 = vcombine.low %v243, %v250
    %v266 = vcombine.low %v257, %v264
    %v268 = vunpack.c.l.s4 1966171168
    %v269 = vunpack.c.0.s8 %v268
    %v270 = vlaneseq
    %v271 = vshrl.u32 %v270, 7
    %v272 = vsub.s32 %v269, %v271
    %v273 = vrot.slane %v265, %v272
    %v275 = vunpack.c.l.s4 1966171168
    %v276 = vunpack.c.0.s8 %v275
    %v277 = vlaneseq
    %v278 = vshrl.u32 %v277, 7
    %v279 = vsub.s32 %v276, %v278
    %v280 = vrot.slane %v266, %v279
    %v281 = vcombine.low %v273, %v280
    %283 = vst [vmem:[#allocation7] sm:$0xff] %v281
    // Predicated region
    $region18: #{tpu_custom_call.1} parent=1 // pred_check
      _
    $region19: #{tpu_custom_call.1} parent=1 // pred_check_branch
      %285 = sbr.rel (0) target = $region21
    $region20: #{tpu_custom_call.1} parent=1 // pred_region
      %s287 = ssub.s32 128, 128
      %288 = vsyncadd [#allocation4], %s287
      %s290 = sshll.u32 [#allocation7], 4
      %s291 = int_to_ptr.vmem [resolvable:$true] %s290
      %293 = dma.vmem_to_hbm [thread:$0]  %s291, 128, %s2, [#allocation4]
    $region21: #{tpu_custom_call.1} parent=1 // pred_fallthru
      _
    // Predicated region
    $region22: #{tpu_custom_call.1} parent=1 // pred_check
      _
    $region23: #{tpu_custom_call.1} parent=1 // pred_check_branch
      %295 = sbr.rel (0) target = $region25
    $region24: #{tpu_custom_call.1} parent=1 // pred_region
      %296 = dma.done [#allocation4], 128
    $region25: #{tpu_custom_call.1} parent=1 // pred_fallthru
      _
    %297 = vsyncpa [#allocation3], 1
    %298 = vsyncpa [#allocation6], 1
    %299 = vsyncpa [#allocation4], 1

</llo_original>
